<compile_context>
chip_gen: v6e
topology: v6e:2x2x1
jax: 0.10.0
libtpu: 0.0.40
codegen_flags: <defaults>
</compile_context>

<pallas_src>
import functools

import jax
import jax.numpy as jnp
from jax import lax
from jax.experimental import pallas as pl
from jax.experimental.pallas import tpu as pltpu


# Large finite negative used instead of -inf inside the online softmax (standard
# flash-attention practice): exp(MASK - real_max) underflows to exactly 0, but
# MASK - MASK == 0 so a fully-masked tile never produces NaN mid-stream.
_MASK_VALUE = -0.7 * float(jnp.finfo(jnp.float32).max)
# Threshold (not exact compare) so the additive-bias masking stays robust.
_MASK_THRESH = 0.5 * _MASK_VALUE


# ---------------------------------------------------------------------------
# Device / tile sizing helpers (generation-aware, with safe fallbacks).
# ---------------------------------------------------------------------------
def _device_kind():
    try:
        return jax.devices()[0].device_kind.lower()
    except Exception:
        return ""


def _tile_targets():
    """(q_tile_target, kv_tile_target).  Raise tq first: it is what cuts K/V HBM re-reads."""
    kind = _device_kind()
    if "v7" in kind:                       # 64 MiB VMEM, fastest HBM: big tq, modest tk
        return 512, 256
    if "v6" in kind:
        return 512, 512
    if "v5" in kind:
        return 512, 512
    return 512, 256                        # unknown: conservative tk


def _supports_bf16_eup():
    kind = _device_kind()
    # v5e and older have no bf16 EUP; v6e / v7x do.
    return not any(g in kind for g in ("v2", "v3", "v4", "v5"))


def _vmem_limit_bytes():
    try:
        cap = int(pltpu.get_tpu_info().vmem_capacity_bytes)
    except Exception:
        cap = 64 * 1024 * 1024
    # Leave headroom for compiler-internal scratch; cap well under physical.
    return min(int(cap * 3 // 4), 96 * 1024 * 1024)


def _sublane_multiple(dtype):
    """Dtype-aware sublane tile multiple: 8 for f32, 16 for bf16, 32 for 8-bit."""
    return max(8, 32 // jnp.dtype(dtype).itemsize)


def _round_up(x, m):
    return ((x + m - 1) // m) * m


def _pick_divisor(dim, target, multiple):
    """Largest t <= target with dim % t == 0 and t % multiple == 0; full dim if small;
    None if no such divisor exists (caller must pad)."""
    if dim <= target:
        return dim                          # full-dim blocks are always layout-legal
    t = (target // multiple) * multiple
    while t >= multiple:
        if dim % t == 0:
            return t
        t -= multiple
    return None


def _choose_tile(dim, target, multiple):
    """Return (tile, padded_dim).  Prefers an exact divisor (no padding); otherwise picks
    the multiple-of-`multiple` tile <= target minimizing padding (ties -> larger tile)."""
    t = _pick_divisor(dim, target, multiple)
    if t is not None:
        return t, dim
    best_t, best_pad = multiple, _round_up(dim, multiple)
    cand = 2 * multiple
    while cand <= target:
        padded = _round_up(dim, cand)
        if padded <= best_pad:
            best_t, best_pad = cand, padded
        cand += multiple
    return best_t, best_pad


# ---------------------------------------------------------------------------
# Kernel bodies.
# ---------------------------------------------------------------------------
def _online_softmax_step(s, v, m_sc, l_sc, acc_sc, exp_dtype):
    """One kv tile of the online-softmax update. s: (tq, tk) f32, v: (tk, D)."""
    m_prev = m_sc[...]
    m_new = jnp.maximum(m_prev, jnp.max(s, axis=-1, keepdims=True))
    alpha = jnp.exp(m_prev - m_new)                       # (tq, 1) rescale of prior partials
    # bf16 exp (v6e/v7x EUP runs bf16 ~2x f32) only when inputs are already bf16,
    # so the PV matmul consumes bf16 probabilities anyway.  Row-sum stays f32.
    p = jnp.exp((s - m_new).astype(exp_dtype))            # (tq, tk)
    l_sc[...] = alpha * l_sc[...] + jnp.sum(p.astype(jnp.float32), axis=-1, keepdims=True)
    acc_sc[...] = alpha * acc_sc[...] + jnp.dot(
        p.astype(v.dtype), v, preferred_element_type=jnp.float32)
    m_sc[...] = m_new


def _init(q_ref, qs_sc, m_sc, l_sc, acc_sc, scale):
    # Hoist the 1/sqrt(D) Q scaling out of the kv loop: computed once per q tile,
    # resident in VMEM scratch (native dtype) across every kv step.
    qs_sc[...] = (q_ref[0] * scale).astype(qs_sc.dtype)
    m_sc[...] = jnp.full_like(m_sc, _MASK_VALUE)
    l_sc[...] = jnp.zeros_like(l_sc)
    acc_sc[...] = jnp.zeros_like(acc_sc)


def _flash_attn_kernel(q_ref, k_ref, v_ref, o_ref, qs_sc, m_sc, l_sc, acc_sc,
                       *, scale, exp_dtype):
    """Unmasked flash attention; one (batch*head, q-tile, kv-tile) grid point."""
    kidx = pl.program_id(2)

    @pl.when(kidx == 0)
    def _():
        _init(q_ref, qs_sc, m_sc, l_sc, acc_sc, scale)

    # NT contraction: contract last dim of both operands (no K transpose), f32 accumulate.
    s = lax.dot_general(qs_sc[...], k_ref[0], (((1,), (1,)), ((), ())),
                        preferred_element_type=jnp.float32)   # (tq, tk)
    _online_softmax_step(s, v_ref[0], m_sc, l_sc, acc_sc, exp_dtype)

    @pl.when(kidx == pl.num_programs(2) - 1)
    def _():
        inv = pl.reciprocal(l_sc[...], approx=False)           # (tq, 1), exact
        o_ref[0] = (acc_sc[...] * inv).astype(o_ref.dtype)


def _flash_attn_kernel_masked(tile_valid_ref, qm_ref, kb_ref, q_ref, k_ref, v_ref,
                              o_ref, qs_sc, m_sc, l_sc, acc_sc,
                              *, scale, exp_dtype, num_heads):
    """Masked flash attention: additive key bias, kv-tile skipping, q-mask in epilogue."""
    kidx = pl.program_id(2)
    n_kv = pl.num_programs(2)

    @pl.when(kidx == 0)
    def _():
        _init(q_ref, qs_sc, m_sc, l_sc, acc_sc, scale)

    batch = pl.program_id(0) // num_heads
    tile_has_valid_key = tile_valid_ref[batch * n_kv + kidx] != 0

    @pl.when(tile_has_valid_key)
    def _():
        s = lax.dot_general(qs_sc[...], k_ref[0], (((1,), (1,)), ((), ())),
                            preferred_element_type=jnp.float32)   # (tq, tk)
        # Additive key bias: 0 where valid, _MASK_VALUE where masked
        # (sublane broadcast of a (1, tk) row; no per-step boolean outer product).
        s = s + kb_ref[0]
        _online_softmax_step(s, v_ref[0], m_sc, l_sc, acc_sc, exp_dtype)

    @pl.when(kidx == n_kv - 1)
    def _():
        inv = pl.reciprocal(l_sc[...], approx=False)
        out = acc_sc[...] * inv
        # PyTorch: a row whose scores are all -inf softmaxes to NaN.  That happens when
        # (a) no key is valid for this batch, or (b) the query itself is masked out.
        no_valid_key = m_sc[...] <= _MASK_THRESH                  # (tq, 1)
        q_row_valid = qm_ref[0] > 0.0                             # (tq, 1)
        keep = jnp.logical_and(q_row_valid, jnp.logical_not(no_valid_key))
        out = jnp.where(keep, out, jnp.nan)
        o_ref[0] = out.astype(o_ref.dtype)


# ---------------------------------------------------------------------------
# Wrappers.
# ---------------------------------------------------------------------------
def full_attention_nhld(q, k, v, q_mask=None, kv_mask=None, *,
                        block_q=None, block_kv=None, matmul_dtype=None):
    """Flash attention on [N, H, L, D]-layout tensors (no layout transposes).

    Args:
      q: [N, H, L, D];  k, v: [N, H, S, D]
      q_mask: [N, L] (optional), kv_mask: [N, S] (optional).
        Per the PyTorch reference, q_mask is only honored when kv_mask is given.
      matmul_dtype: optional dtype (e.g. jnp.bfloat16) to cast q/k/v to before the
        kernel — bf16 MXU fast path for f32 callers (f32 accumulation is kept).
    Returns:
      [N, H, L, D] in the (possibly cast) input dtype.
    """
    if matmul_dtype is not None:
        q = q.astype(matmul_dtype)
        k = k.astype(matmul_dtype)
        v = v.astype(matmul_dtype)

    N, H, L, D = q.shape
    S = k.shape[2]

    tq_target, tk_target = _tile_targets()
    sub = _sublane_multiple(q.dtype)

    if block_q is not None:
        assert block_q % sub == 0 or block_q == L, "block_q must be a sublane multiple"
        tq, L_pad = block_q, _round_up(L, block_q)
    else:
        tq, L_pad = _choose_tile(L, tq_target, sub)
    if block_kv is not None:
        assert block_kv % 128 == 0 or block_kv == S, "block_kv must be a multiple of 128"
        tk, S_pad = block_kv, _round_up(S, block_kv)
    else:
        tk, S_pad = _choose_tile(S, tk_target, 128)

    pad_L = L_pad - L
    pad_S = S_pad - S

    # Collapse (N, H) into one leading parallel grid axis.
    q3 = q.reshape(N * H, L, D)
    k3 = k.reshape(N * H, S, D)
    v3 = v.reshape(N * H, S, D)
    if pad_L:
        q3 = jnp.pad(q3, ((0, 0), (0, pad_L), (0, 0)))
    if pad_S:
        k3 = jnp.pad(k3, ((0, 0), (0, pad_S), (0, 0)))
        v3 = jnp.pad(v3, ((0, 0), (0, pad_S), (0, 0)))

    grid = (N * H, L_pad // tq, S_pad // tk)
    out_shape = jax.ShapeDtypeStruct((N * H, L_pad, D), q.dtype)
    scratch = [pltpu.VMEM((tq, D), q.dtype),     # pre-scaled Q tile (resident across kv)
               pltpu.VMEM((tq, 1), jnp.float32),  # running max
               pltpu.VMEM((tq, 1), jnp.float32),  # running row-sum
               pltpu.VMEM((tq, D), jnp.float32)]  # output accumulator
    cparams = pltpu.CompilerParams(
        dimension_semantics=("parallel", "parallel", "arbitrary"),
        vmem_limit_bytes=_vmem_limit_bytes())

    scale = 1.0 / float(D) ** 0.5
    exp_dtype = (jnp.bfloat16
                 if (q.dtype == jnp.bfloat16 and _supports_bf16_eup())
                 else jnp.float32)

    # Masking is needed if the caller asked for it OR we padded keys (pad keys must be killed).
    use_mask = (kv_mask is not None) or (pad_S > 0)

    if not use_mask:
        kernel = functools.partial(_flash_attn_kernel, scale=scale, exp_dtype=exp_dtype)
        out3 = pl.pallas_call(
            kernel,
            out_shape=out_shape,
            grid=grid,
            in_specs=[pl.BlockSpec((1, tq, D), lambda b, i, j: (b, i, 0)),
                      pl.BlockSpec((1, tk, D), lambda b, i, j: (b, j, 0)),
                      pl.BlockSpec((1, tk, D), lambda b, i, j: (b, j, 0))],
            out_specs=pl.BlockSpec((1, tq, D), lambda b, i, j: (b, i, 0)),
            scratch_shapes=scratch,
            compiler_params=cparams,
        )(q3, k3, v3)
    else:
        if kv_mask is None:
            # Only padding forced the masked path; PyTorch ignores q_mask without kv_mask.
            q_mask_eff = jnp.ones((N, L), dtype=bool)
            kvm = jnp.ones((N, S), dtype=bool)
        else:
            q_mask_eff = q_mask if q_mask is not None else jnp.ones((N, L), dtype=bool)
            kvm = kv_mask
        qm = q_mask_eff.astype(jnp.float32)
        if pad_L:
            qm = jnp.pad(qm, ((0, 0), (0, pad_L)))             # padded queries -> masked
        qm = qm.reshape(N, L_pad, 1)
        if pad_S:
            kvm = jnp.pad(kvm, ((0, 0), (0, pad_S)))           # padded keys -> invalid
        # Additive key bias: 0 for valid keys, _MASK_VALUE for masked keys.
        kb = jnp.where(kvm, 0.0, _MASK_VALUE).astype(jnp.float32).reshape(N, 1, S_pad)
        # Per-(batch, kv-tile) "any valid key" flags -> SMEM via scalar prefetch.
        n_kv_tiles = S_pad // tk
        tile_valid = jnp.any(kvm.reshape(N, n_kv_tiles, tk), axis=-1)
        tile_valid = tile_valid.astype(jnp.int32).reshape(N * n_kv_tiles)

        kernel = functools.partial(_flash_attn_kernel_masked, scale=scale,
                                   exp_dtype=exp_dtype, num_heads=H)
        grid_spec = pltpu.PrefetchScalarGridSpec(
            num_scalar_prefetch=1,
            grid=grid,
            in_specs=[
                pl.BlockSpec((1, tq, 1), lambda b, i, j, tv: (b // H, i, 0)),   # q mask
                pl.BlockSpec((1, 1, tk), lambda b, i, j, tv: (b // H, 0, j)),   # key bias
                pl.BlockSpec((1, tq, D), lambda b, i, j, tv: (b, i, 0)),        # q
                pl.BlockSpec((1, tk, D), lambda b, i, j, tv: (b, j, 0)),        # k
                pl.BlockSpec((1, tk, D), lambda b, i, j, tv: (b, j, 0)),        # v
            ],
            out_specs=pl.BlockSpec((1, tq, D), lambda b, i, j, tv: (b, i, 0)),
            scratch_shapes=scratch)
        out3 = pl.pallas_call(
            kernel,
            out_shape=out_shape,
            grid_spec=grid_spec,
            compiler_params=cparams,
        )(tile_valid, qm, kb, q3, k3, v3)

    if pad_L:
        out3 = out3[:, :L, :]
    return out3.reshape(N, H, L, D)


def full_attention(queries, keys, values, q_mask=None, kv_mask=None, *,
                   block_q=None, block_kv=None, matmul_dtype=None):
    """PyTorch-layout FullAttention.forward: [N, L, H, D] in / out.

    Note: callers that can consume the [N, H, L, D] layout should call
    full_attention_nhld directly to avoid the HBM transpose passes.
    """
    qt = jnp.transpose(queries, (0, 2, 1, 3))
    kt = jnp.transpose(keys, (0, 2, 1, 3))
    vt = jnp.transpose(values, (0, 2, 1, 3))
    out = full_attention_nhld(qt, kt, vt, q_mask, kv_mask,
                              block_q=block_q, block_kv=block_kv,
                              matmul_dtype=matmul_dtype)
    return jnp.transpose(out, (0, 2, 1, 3))


# ---------------------------------------------------------------------------
# Pure-JAX reference matching the PyTorch forward exactly.
# ---------------------------------------------------------------------------
def _reference_attention(queries, keys, values, q_mask=None, kv_mask=None):
    QK = jnp.einsum('nlhd,nshd->nlsh', queries, keys, precision='highest')
    if kv_mask is not None:
        mask = q_mask[:, :, None, None] & kv_mask[:, None, :, None]
        QK = jnp.where(mask, QK, -jnp.inf)
    softmax_temp = 1.0 / queries.shape[3] ** 0.5
    A = jax.nn.softmax(softmax_temp * QK, axis=2)
    return jnp.einsum('nlsh,nshd->nlhd', A, values, precision='highest')


if __name__ == "__main__":
    key = jax.random.PRNGKey(0)

    # ---- small shapes (PyTorch convention), unmasked + masked paths ----
    N, L, S, H, D = 2, 16, 16, 2, 32
    kq, kk, kv, key2, key3 = jax.random.split(key, 5)
    queries = jax.random.normal(kq, (N, L, H, D), dtype=jnp.float32)
    keys = jax.random.normal(kk, (N, S, H, D), dtype=jnp.float32)
    values = jax.random.normal(kv, (N, S, H, D), dtype=jnp.float32)

    q_mask = jnp.ones((N, L), dtype=bool)
    kv_mask = jnp.broadcast_to(jnp.arange(S)[None, :] < (S - 3), (N, S))

    out_plain = jax.block_until_ready(full_attention(queries, keys, values))
    ref_plain = _reference_attention(queries, keys, values)
    assert out_plain.shape == (N, L, H, D)
    assert jnp.allclose(out_plain, ref_plain, rtol=2e-5, atol=2e-5), "unmasked mismatch"

    out_masked = jax.block_until_ready(
        full_attention(queries, keys, values, q_mask=q_mask, kv_mask=kv_mask))
    ref_masked = _reference_attention(queries, keys, values, q_mask, kv_mask)
    assert out_masked.shape == (N, L, H, D)
    assert jnp.allclose(out_masked, ref_masked, rtol=2e-5, atol=2e-5), "masked mismatch"

    # ---- bf16 inputs (exercises bf16 MXU path + bf16 exp on v6e/v7x) ----
    out_bf = jax.block_until_ready(
        full_attention(queries.astype(jnp.bfloat16), keys.astype(jnp.bfloat16),
                       values.astype(jnp.bfloat16), q_mask=q_mask, kv_mask=kv_mask))
    assert out_bf.shape == (N, L, H, D)
    assert jnp.allclose(out_bf.astype(jnp.float32), ref_masked, rtol=4e-2, atol=4e-2), \
        "bf16 masked mismatch"

    # ---- multi-tile path: online softmax across kv tiles, including a fully
    #      masked first kv tile (exercises the kv-tile skip + rescale) ----
    N2, L2, S2, H2, D2 = 1, 256, 256, 2, 64
    ka, kb, kc = jax.random.split(key2, 3)
    q2 = jax.random.normal(ka, (N2, L2, H2, D2), dtype=jnp.float32)
    k2 = jax.random.normal(kb, (N2, S2, H2, D2), dtype=jnp.float32)
    v2 = jax.random.normal(kc, (N2, S2, H2, D2), dtype=jnp.float32)
    qm2 = jnp.ones((N2, L2), dtype=bool)
    km2 = jnp.broadcast_to(jnp.arange(S2)[None, :] >= 128, (N2, S2))

    out_tiled = jax.block_until_ready(
        full_attention(q2, k2, v2, q_mask=qm2, kv_mask=km2,
                       block_q=128, block_kv=128))
    ref_tiled = _reference_attention(q2, k2, v2, qm2, km2)
    assert out_tiled.shape == (N2, L2, H2, D2)
    assert jnp.allclose(out_tiled, ref_tiled, rtol=2e-5, atol=2e-5), "tiled masked mismatch"

    # ---- awkward (non-dividing) shapes: exercises q-axis padding plus kv-axis padding
    #      with a synthesized key bias (unmasked semantics must be preserved) ----
    N3, L3, S3, H3, D3 = 1, 96, 200, 2, 64
    kd, ke, kf = jax.random.split(key3, 3)
    q3 = jax.random.normal(kd, (N3, L3, H3, D3), dtype=jnp.float32)
    k3 = jax.random.normal(ke, (N3, S3, H3, D3), dtype=jnp.float32)
    v3 = jax.random.normal(kf, (N3, S3, H3, D3), dtype=jnp.float32)
    out_pad = jax.block_until_ready(
        full_attention(q3, k3, v3, block_q=64, block_kv=128))
    ref_pad = _reference_attention(q3, k3, v3)
    assert out_pad.shape == (N3, L3, H3, D3)
    assert jnp.allclose(out_pad, ref_pad, rtol=2e-5, atol=2e-5), "padded-shape mismatch"

    print("KERNEL_OK")
</pallas_src>

<mosaic_0001>
module attributes {stable_mosaic.version = 11 : i64} {
  func.func @_flash_attn_kernel(%arg0: i32, %arg1: i32, %arg2: i32, %arg3: memref<1x16x32xf32, #tpu.memory_space<vmem>>, %arg4: memref<1x16x32xf32, #tpu.memory_space<vmem>>, %arg5: memref<1x16x32xf32, #tpu.memory_space<vmem>>, %arg6: memref<1x16x32xf32, #tpu.memory_space<vmem>>, %arg7: memref<16x32xf32, #tpu.memory_space<vmem>>, %arg8: memref<16x1xf32, #tpu.memory_space<vmem>>, %arg9: memref<16x1xf32, #tpu.memory_space<vmem>>, %arg10: memref<16x32xf32, #tpu.memory_space<vmem>>) attributes {dimension_semantics = [#tpu.dimension_semantics<parallel>, #tpu.dimension_semantics<parallel>, #tpu.dimension_semantics<arbitrary>], iteration_bounds = array<i64: 4, 1, 1>, scalar_prefetch = 0 : i64, scratch_operands = 4 : i64, tpu.core_type = #tpu.core_type<tc>, window_params = [{transform_indices = @transform_0, window_bounds = array<i64: 1, 16, 32>}, {transform_indices = @transform_1, window_bounds = array<i64: 1, 16, 32>}, {transform_indices = @transform_2, window_bounds = array<i64: 1, 16, 32>}, {transform_indices = @transform_3, window_bounds = array<i64: 1, 16, 32>}]} {
    %c0_i32 = arith.constant 0 : i32
    %0 = arith.cmpi eq, %arg2, %c0_i32 : i32
    %1 = arith.extui %0 : i1 to i32
    %c0_i32_0 = arith.constant 0 : i32
    %2 = arith.cmpi ne, %1, %c0_i32_0 : i32
    scf.if %2 {
      %c0_25 = arith.constant 0 : index
      %c0_26 = arith.constant 0 : index
      %c0_27 = arith.constant 0 : index
      %34 = vector.load %arg3[%c0_25, %c0_26, %c0_27] : memref<1x16x32xf32, #tpu.memory_space<vmem>>, vector<1x16x32xf32>
      %35 = vector.shape_cast %34 : vector<1x16x32xf32> to vector<16x32xf32>
      %cst_28 = arith.constant 0.176776692 : f32
      %36 = vector.broadcast %cst_28 : f32 to vector<16x32xf32>
      %37 = arith.mulf %35, %36 : vector<16x32xf32>
      %c0_29 = arith.constant 0 : index
      %c0_30 = arith.constant 0 : index
      %38 = vector.load %arg7[%c0_29, %c0_30] : memref<16x32xf32, #tpu.memory_space<vmem>>, vector<16x32xf32>
      tpu.vector_store %arg7[%c0_29, %c0_30], %37 {strides = array<i32>} : memref<16x32xf32, #tpu.memory_space<vmem>>, vector<16x32xf32>,
      %cst_31 = arith.constant -2.38197633E+38 : f32
      %39 = vector.broadcast %cst_31 : f32 to vector<16x1xf32>
      %c0_32 = arith.constant 0 : index
      %c0_33 = arith.constant 0 : index
      %40 = vector.load %arg8[%c0_32, %c0_33] : memref<16x1xf32, #tpu.memory_space<vmem>>, vector<16x1xf32>
      tpu.vector_store %arg8[%c0_32, %c0_33], %39 {strides = array<i32>} : memref<16x1xf32, #tpu.memory_space<vmem>>, vector<16x1xf32>,
      %cst_34 = arith.constant 0.000000e+00 : f32
      %41 = vector.broadcast %cst_34 : f32 to vector<16x1xf32>
      %c0_35 = arith.constant 0 : index
      %c0_36 = arith.constant 0 : index
      %42 = vector.load %arg9[%c0_35, %c0_36] : memref<16x1xf32, #tpu.memory_space<vmem>>, vector<16x1xf32>
      tpu.vector_store %arg9[%c0_35, %c0_36], %41 {strides = array<i32>} : memref<16x1xf32, #tpu.memory_space<vmem>>, vector<16x1xf32>,
      %cst_37 = arith.constant 0.000000e+00 : f32
      %43 = vector.broadcast %cst_37 : f32 to vector<16x32xf32>
      %c0_38 = arith.constant 0 : index
      %c0_39 = arith.constant 0 : index
      %44 = vector.load %arg10[%c0_38, %c0_39] : memref<16x32xf32, #tpu.memory_space<vmem>>, vector<16x32xf32>
      tpu.vector_store %arg10[%c0_38, %c0_39], %43 {strides = array<i32>} : memref<16x32xf32, #tpu.memory_space<vmem>>, vector<16x32xf32>,
    } else {
    }
    %c0 = arith.constant 0 : index
    %c0_1 = arith.constant 0 : index
    %3 = vector.load %arg7[%c0, %c0_1] : memref<16x32xf32, #tpu.memory_space<vmem>>, vector<16x32xf32>
    %c0_2 = arith.constant 0 : index
    %c0_3 = arith.constant 0 : index
    %c0_4 = arith.constant 0 : index
    %4 = vector.load %arg4[%c0_2, %c0_3, %c0_4] : memref<1x16x32xf32, #tpu.memory_space<vmem>>, vector<1x16x32xf32>
    %5 = vector.shape_cast %4 : vector<1x16x32xf32> to vector<16x32xf32>
    %cst = arith.constant dense<0.000000e+00> : vector<16x16xf32>
    %6 = tpu.matmul %3, %5, %cst {dimension_numbers = #tpu.dot_dimension_numbers<[1], [1], [0], [0], [0, 0, 1, 0], [], []>} : vector<16x32xf32>, vector<16x32xf32>, vector<16x16xf32> -> vector<16x16xf32>
    %c0_5 = arith.constant 0 : index
    %c0_6 = arith.constant 0 : index
    %c0_7 = arith.constant 0 : index
    %7 = vector.load %arg5[%c0_5, %c0_6, %c0_7] : memref<1x16x32xf32, #tpu.memory_space<vmem>>, vector<1x16x32xf32>
    %8 = vector.shape_cast %7 : vector<1x16x32xf32> to vector<16x32xf32>
    %c0_8 = arith.constant 0 : index
    %c0_9 = arith.constant 0 : index
    %9 = vector.load %arg8[%c0_8, %c0_9] : memref<16x1xf32, #tpu.memory_space<vmem>>, vector<16x1xf32>
    %cst_10 = arith.constant dense<0xFF800000> : vector<16xf32>
    %10 = vector.multi_reduction <maximumf>, %6, %cst_10 [1] : vector<16x16xf32> to vector<16xf32>
    %11 = vector.shape_cast %10 : vector<16xf32> to vector<16x1xf32>
    %12 = arith.maximumf %9, %11 : vector<16x1xf32>
    %13 = arith.subf %9, %12 : vector<16x1xf32>
    %14 = math.exp %13 : vector<16x1xf32>
    %15 = vector.broadcast %12 : vector<16x1xf32> to vector<16x16xf32>
    %16 = arith.subf %6, %15 : vector<16x16xf32>
    %17 = math.exp %16 : vector<16x16xf32>
    %c0_11 = arith.constant 0 : index
    %c0_12 = arith.constant 0 : index
    %18 = vector.load %arg9[%c0_11, %c0_12] : memref<16x1xf32, #tpu.memory_space<vmem>>, vector<16x1xf32>
    %19 = arith.mulf %14, %18 : vector<16x1xf32>
    %cst_13 = arith.constant dense<0.000000e+00> : vector<16xf32>
    %20 = vector.multi_reduction <add>, %17, %cst_13 [1] : vector<16x16xf32> to vector<16xf32>
    %21 = vector.shape_cast %20 : vector<16xf32> to vector<16x1xf32>
    %22 = arith.addf %19, %21 : vector<16x1xf32>
    %c0_14 = arith.constant 0 : index
    %c0_15 = arith.constant 0 : index
    %23 = vector.load %arg9[%c0_14, %c0_15] : memref<16x1xf32, #tpu.memory_space<vmem>>, vector<16x1xf32>
    tpu.vector_store %arg9[%c0_14, %c0_15], %22 {strides = array<i32>} : memref<16x1xf32, #tpu.memory_space<vmem>>, vector<16x1xf32>,
    %c0_16 = arith.constant 0 : index
    %c0_17 = arith.constant 0 : index
    %24 = vector.load %arg10[%c0_16, %c0_17] : memref<16x32xf32, #tpu.memory_space<vmem>>, vector<16x32xf32>
    %25 = vector.broadcast %14 : vector<16x1xf32> to vector<16x32xf32>
    %26 = arith.mulf %25, %24 : vector<16x32xf32>
    %cst_18 = arith.constant dense<0.000000e+00> : vector<16x32xf32>
    %27 = tpu.matmul %17, %8, %cst_18 {dimension_numbers = #tpu.dot_dimension_numbers<[1], [0], [0], [1], [0, 0, 1, 1], [], []>} : vector<16x16xf32>, vector<16x32xf32>, vector<16x32xf32> -> vector<16x32xf32>
    %28 = arith.addf %26, %27 : vector<16x32xf32>
    %c0_19 = arith.constant 0 : index
    %c0_20 = arith.constant 0 : index
    %29 = vector.load %arg10[%c0_19, %c0_20] : memref<16x32xf32, #tpu.memory_space<vmem>>, vector<16x32xf32>
    tpu.vector_store %arg10[%c0_19, %c0_20], %28 {strides = array<i32>} : memref<16x32xf32, #tpu.memory_space<vmem>>, vector<16x32xf32>,
    %c0_21 = arith.constant 0 : index
    %c0_22 = arith.constant 0 : index
    %30 = vector.load %arg8[%c0_21, %c0_22] : memref<16x1xf32, #tpu.memory_space<vmem>>, vector<16x1xf32>
    tpu.vector_store %arg8[%c0_21, %c0_22], %12 {strides = array<i32>} : memref<16x1xf32, #tpu.memory_space<vmem>>, vector<16x1xf32>,
    %c0_i32_23 = arith.constant 0 : i32
    %31 = arith.cmpi eq, %arg2, %c0_i32_23 : i32
    %32 = arith.extui %31 : i1 to i32
    %c0_i32_24 = arith.constant 0 : i32
    %33 = arith.cmpi ne, %32, %c0_i32_24 : i32
    scf.if %33 {
      %c0_25 = arith.constant 0 : index
      %c0_26 = arith.constant 0 : index
      %34 = vector.load %arg9[%c0_25, %c0_26] : memref<16x1xf32, #tpu.memory_space<vmem>>, vector<16x1xf32>
      %35 = tpu.reciprocal %34 : vector<16x1xf32> -> vector<16x1xf32>
      %c0_27 = arith.constant 0 : index
      %c0_28 = arith.constant 0 : index
      %36 = vector.load %arg10[%c0_27, %c0_28] : memref<16x32xf32, #tpu.memory_space<vmem>>, vector<16x32xf32>
      %37 = vector.broadcast %35 : vector<16x1xf32> to vector<16x32xf32>
      %38 = arith.mulf %36, %37 : vector<16x32xf32>
      %c0_29 = arith.constant 0 : index
      %c0_30 = arith.constant 0 : index
      %c0_31 = arith.constant 0 : index
      %39 = vector.load %arg6[%c0_29, %c0_30, %c0_31] : memref<1x16x32xf32, #tpu.memory_space<vmem>>, vector<1x16x32xf32>
      %40 = vector.shape_cast %39 : vector<1x16x32xf32> to vector<16x32xf32>
      %41 = vector.shape_cast %38 : vector<16x32xf32> to vector<1x16x32xf32>
      tpu.vector_store %arg6[%c0_29, %c0_30, %c0_31], %41 {strides = array<i32>} : memref<1x16x32xf32, #tpu.memory_space<vmem>>, vector<1x16x32xf32>,
    } else {
    }
    return
  }
  func.func @transform_0(%arg0: i32, %arg1: i32, %arg2: i32) -> (i32, i32, i32) {
    %c0_i32 = arith.constant 0 : i32
    %c0_i32_0 = arith.constant 0 : i32
    return %arg0, %arg1, %c0_i32 : i32, i32, i32
  }
  func.func @transform_1(%arg0: i32, %arg1: i32, %arg2: i32) -> (i32, i32, i32) {
    %c0_i32 = arith.constant 0 : i32
    %c0_i32_0 = arith.constant 0 : i32
    return %arg0, %arg2, %c0_i32 : i32, i32, i32
  }
  func.func @transform_2(%arg0: i32, %arg1: i32, %arg2: i32) -> (i32, i32, i32) {
    %c0_i32 = arith.constant 0 : i32
    %c0_i32_0 = arith.constant 0 : i32
    return %arg0, %arg2, %c0_i32 : i32, i32, i32
  }
  func.func @transform_3(%arg0: i32, %arg1: i32, %arg2: i32) -> (i32, i32, i32) {
    %c0_i32 = arith.constant 0 : i32
    %c0_i32_0 = arith.constant 0 : i32
    return %arg0, %arg1, %c0_i32 : i32, i32, i32
  }
}

</mosaic_0001>

<llo_original>
// kernel: tpu_custom_call.1
$region0: #{tpu_custom_call.1}
  #allocation0 [shape = 'u32[]', space=smem, size = 0x4, offset = 0x4, fixed_abs, tag = 'smem constant byte address 0x4 - core index']
  #allocation1 [shape = 'u32[144,128]{1,0:T(1,128)}', space=vmem, size = 0x12000, scoped, tag = 'internal scratch']
  #allocation2 [shape = 'f32[16,32]{1,0:T(8,128)}', space=vmem, size = 0x2000, scoped, tag = 'scratch operand']
  #allocation3 [shape = 'f32[16,1]{1,0:T(8,128)}', space=vmem, size = 0x2000, scoped, tag = 'scratch operand']
  #allocation4 [shape = 'f32[16,1]{1,0:T(8,128)}', space=vmem, size = 0x2000, scoped, tag = 'scratch operand']
  #allocation5 [shape = 'f32[16,32]{1,0:T(8,128)}', space=vmem, size = 0x2000, scoped, tag = 'scratch operand']
  %s0 = inlined_call_operand.hbm [shape: f32[4,16,32], index: 0, kind: input, shape index: {}]
  %s1 = inlined_call_operand.hbm [shape: f32[4,16,32], index: 1, kind: input, shape index: {}]
  %s2 = inlined_call_operand.hbm [shape: f32[4,16,32], index: 2, kind: input, shape index: {}]
  %s3 = inlined_call_operand.hbm [shape: f32[4,16,32], index: 3, kind: output, shape index: {}]
  %s4 = sld [smem:[#allocation0]]
  $region65: #{tpu_custom_call.1} parent=0
    _
  %s6 = ssub.s32 1, %s4
  %s7 = scalar_select 0, %s6, %s4
  $region1: #{tpu_custom_call.1} parent=0
    #allocation6 [shape = 'u8[16384]{0}', space=vmem, size = 0x4000, scoped, tag = 'input window, operand 0']
    #allocation7 [shape = 's32[2]{0}', space=sflag, size = 0x8, scoped, tag = 'scoped memory for tpu_custom_call.1']
    #allocation8 [shape = 's32[2]{0}', space=sflag, size = 0x8, scoped, tag = 'scoped memory for tpu_custom_call.1']
    #allocation9 [shape = 'u8[16384]{0}', space=vmem, size = 0x4000, scoped, tag = 'input window, operand 1']
    #allocation10 [shape = 's32[2]{0}', space=sflag, size = 0x8, scoped, tag = 'scoped memory for tpu_custom_call.1']
    #allocation11 [shape = 'u8[16384]{0}', space=vmem, size = 0x4000, scoped, tag = 'input window, operand 2']
    #allocation12 [shape = 'u8[16384]{0}', space=vmem, size = 0x4000, scoped, tag = 'output window, operand 0']
    %8 = vsyncpa [#allocation7], 0
    %s9 = scalar_lea.sflag [#allocation7], 1
    %10 = vsyncpa %s9, 0
    %11 = vsyncpa [#allocation10], 0
    %s12 = scalar_lea.sflag [#allocation10], 1
    %13 = vsyncpa %s12, 0
    %14 = vsyncpa [#allocation8], 0
    %s15 = scalar_lea.sflag [#allocation8], 1
    %16 = vsyncpa %s15, 0
    loop: start=0, step=1, limit=6
    $region2: #{tpu_custom_call.1} parent=1 // loop_pre_header
      _
    $region3: #{tpu_custom_call.1} parent=1 // loop_header
      %s18 = sphi 0, %s22
      %p19 = scmp.ge.s32.totalorder %s18, 6
      %s25 = sphi 0, %s44
      %s26 = sphi 0, %s40
      %s27 = sphi 0, %s36
      %s28 = sphi 0, %s25
      %s29 = sphi 0, %s26
      %s30 = sphi 0, %s27
      %s31 = sphi 0, %s28
      %s32 = sphi 0, %s29
      %s33 = sphi 0, %s30
      %s49 = sphi 0, %s51
      %s52 = sphi 0, %s49
      %s53 = sphi 0, %s52
      %s69 = sphi 0, %s53
      %s77 = sphi 0, %s79
      %s80 = sphi 0, %s77
      %s81 = sphi 0, %s80
      %s97 = sphi 0, %s81
      %s105 = sphi 0, %s107
      %s108 = sphi 0, %s105
      %s109 = sphi 0, %s108
      %s125 = sphi 0, %s109
      %s133 = sphi 0, %s135
      %s136 = sphi 0, %s133
      %s137 = sphi 0, %s136
      %s153 = sphi 0, %s137
    $region4: #{tpu_custom_call.1} parent=1 // loop_header_branch
      %21 = sbr.rel (%p19) target = $region8
    $region5: #{tpu_custom_call.1} parent=1 // loop_body
      %s23 = ssub.s32 %s18, 1
      %s24 = ssub.s32 %s18, 2
      %s34 = sadd.s32 1, %s27
      %p35 = scmp.ge.s32.totalorder %s34, 1
      %s36 = scalar_select %p35, 0, %s34
      %s37 = sadd.s32 1, %s26
      %s38 = scalar_select %p35, %s37, %s26
      %p39 = scmp.ge.s32.totalorder %s38, 1
      %s40 = scalar_select %p39, 0, %s38
      %s41 = sadd.s32 1, %s25
      %s42 = scalar_select %p39, %s41, %s25
      %p43 = scmp.ge.s32.totalorder %s42, 4
      %s44 = scalar_select %p43, 0, %s42
      %s45 = ssub.s32 %s25, %s44
      %s46 = ssub.s32 %s26, %s40
      %s47 = sor.u32 %s45, %s46
      %p48 = scmp.eq.s32.totalorder %s47, 0
      %s50 = sadd.s32 %s49, 1
      %s51 = scalar_select %p48, %s49, %s50
      %p54 = pneg %p48
      %p55 = scmp.eq.s32.totalorder %s18, 3
      %p56 = por %p54, %p55
      %p57 = scmp.ne.s32.totalorder %s49, %s52
      %p58 = scmp.eq.s32.totalorder %s18, 0
      %p59 = por %p57, %p58
      %p60 = scmp.ne.s32.totalorder %s49, %s52
      %p61 = scmp.eq.s32.totalorder %s23, 3
      %p62 = por %p60, %p61
      %p63 = scmp.ne.s32.totalorder %s52, %s53
      %p64 = scmp.eq.s32.totalorder %s23, 0
      %p65 = por %p63, %p64
      %p66 = scmp.ne.s32.totalorder %s52, %s53
      %p67 = scmp.eq.s32.totalorder %s24, 3
      %p68 = por %p66, %p67
      %p70 = scmp.ne.s32.totalorder %s53, %s69
      %p71 = scmp.eq.s32.totalorder %s24, 0
      %p72 = por %p70, %p71
      %s73 = ssub.s32 %s25, %s44
      %s74 = ssub.s32 %s27, %s36
      %s75 = sor.u32 %s73, %s74
      %p76 = scmp.eq.s32.totalorder %s75, 0
      %s78 = sadd.s32 %s77, 1
      %s79 = scalar_select %p76, %s77, %s78
      %p82 = pneg %p76
      %p83 = scmp.eq.s32.totalorder %s18, 3
      %p84 = por %p82, %p83
      %p85 = scmp.ne.s32.totalorder %s77, %s80
      %p86 = scmp.eq.s32.totalorder %s18, 0
      %p87 = por %p85, %p86
      %p88 = scmp.ne.s32.totalorder %s77, %s80
      %p89 = scmp.eq.s32.totalorder %s23, 3
      %p90 = por %p88, %p89
      %p91 = scmp.ne.s32.totalorder %s80, %s81
      %p92 = scmp.eq.s32.totalorder %s23, 0
      %p93 = por %p91, %p92
      %p94 = scmp.ne.s32.totalorder %s80, %s81
      %p95 = scmp.eq.s32.totalorder %s24, 3
      %p96 = por %p94, %p95
      %p98 = scmp.ne.s32.totalorder %s81, %s97
      %p99 = scmp.eq.s32.totalorder %s24, 0
      %p100 = por %p98, %p99
      %s101 = ssub.s32 %s25, %s44
      %s102 = ssub.s32 %s27, %s36
      %s103 = sor.u32 %s101, %s102
      %p104 = scmp.eq.s32.totalorder %s103, 0
      %s106 = sadd.s32 %s105, 1
      %s107 = scalar_select %p104, %s105, %s106
      %p110 = pneg %p104
      %p111 = scmp.eq.s32.totalorder %s18, 3
      %p112 = por %p110, %p111
      %p113 = scmp.ne.s32.totalorder %s105, %s108
      %p114 = scmp.eq.s32.totalorder %s18, 0
      %p115 = por %p113, %p114
      %p116 = scmp.ne.s32.totalorder %s105, %s108
      %p117 = scmp.eq.s32.totalorder %s23, 3
      %p118 = por %p116, %p117
      %p119 = scmp.ne.s32.totalorder %s108, %s109
      %p120 = scmp.eq.s32.totalorder %s23, 0
      %p121 = por %p119, %p120
      %p122 = scmp.ne.s32.totalorder %s108, %s109
      %p123 = scmp.eq.s32.totalorder %s24, 3
      %p124 = por %p122, %p123
      %p126 = scmp.ne.s32.totalorder %s109, %s125
      %p127 = scmp.eq.s32.totalorder %s24, 0
      %p128 = por %p126, %p127
      %s129 = ssub.s32 %s25, %s44
      %s130 = ssub.s32 %s26, %s40
      %s131 = sor.u32 %s129, %s130
      %p132 = scmp.eq.s32.totalorder %s131, 0
      %s134 = sadd.s32 %s133, 1
      %s135 = scalar_select %p132, %s133, %s134
      %p138 = pneg %p132
      %p139 = scmp.eq.s32.totalorder %s18, 3
      %p140 = por %p138, %p139
      %p141 = scmp.ne.s32.totalorder %s133, %s136
      %p142 = scmp.eq.s32.totalorder %s18, 0
      %p143 = por %p141, %p142
      %p144 = scmp.ne.s32.totalorder %s133, %s136
      %p145 = scmp.eq.s32.totalorder %s23, 3
      %p146 = por %p144, %p145
      %p147 = scmp.ne.s32.totalorder %s136, %s137
      %p148 = scmp.eq.s32.totalorder %s23, 0
      %p149 = por %p147, %p148
      %p150 = scmp.ne.s32.totalorder %s136, %s137
      %p151 = scmp.eq.s32.totalorder %s24, 3
      %p152 = por %p150, %p151
      %p154 = scmp.ne.s32.totalorder %s137, %s153
      %p155 = scmp.eq.s32.totalorder %s24, 0
      %p156 = por %p154, %p155
      %p157 = scmp.le.s32.totalorder 1, %s18
      %p158 = scmp.lt.s32.totalorder %s18, 5
      %p159 = pnand %p157, %p158
      %p160 = pneg %p159
      // Predicated region
      $region9: #{tpu_custom_call.1} parent=5 // pred_check
        _
      $region10: #{tpu_custom_call.1} parent=5 // pred_check_branch
        %162 = sbr.rel (%p159) target = $region12
      $region11: #{tpu_custom_call.1} parent=5 // pred_region
        %s163 = ssub.s32 %s18, 1
      $region12: #{tpu_custom_call.1} parent=5 // pred_fallthru
        _
      %p164 = scmp.lt.s32.totalorder %s18, 4
      // Predicated region
      $region13: #{tpu_custom_call.1} parent=5 // pred_check
        %p165 = pneg %p164
      $region14: #{tpu_custom_call.1} parent=5 // pred_check_branch
        %167 = sbr.rel (%p165) target = $region16
      $region15: #{tpu_custom_call.1} parent=5 // pred_region
        // Predicated region
        $region17: #{tpu_custom_call.1} parent=15 // pred_check
          %p168 = pneg %p59
        $region18: #{tpu_custom_call.1} parent=15 // pred_check_branch
          %170 = sbr.rel (%p168) target = $region20
        $region19: #{tpu_custom_call.1} parent=15 // pred_region
          %s171 = sand.u32 %s49, 1
          %s172 = scalar_lea.sflag [#allocation7], %s171
          %s173 = sand.u32 %s49, 1
          %s174 = smul.addr %s173, 16
          %s175 = scalar_lea.vmem [#allocation6], %s174
          %s176 = smul.u32 2, %s26
          %s178 = ssub.s32 256, 256
          %179 = vsyncadd %s172, %s178
          %s180 = smul.addr %s25, 2
          %s181 = sadd.s32 %s176, %s180
          %s182 = smul.addr %s181, 128
          %s183 = scalar_lea.hbm %s0, %s182
          %s184 = sshll.u32 %s175, 4
          %s185 = int_to_ptr.vmem [resolvable:$true] %s184
          %190 = dma.hbm_to_vmem [thread:$0]  %s183, 256, %s185, %s172, 128, 128, 8
        $region20: #{tpu_custom_call.1} parent=15 // pred_fallthru
          _
        // Predicated region
        $region21: #{tpu_custom_call.1} parent=15 // pred_check
          %p191 = pneg %p87
        $region22: #{tpu_custom_call.1} parent=15 // pred_check_branch
          %193 = sbr.rel (%p191) target = $region24
        $region23: #{tpu_custom_call.1} parent=15 // pred_region
          %s194 = sand.u32 %s18, 1
          %s195 = scalar_lea.sflag [#allocation10], %s194
          %s196 = sand.u32 %s77, 1
          %s197 = smul.addr %s196, 16
          %s198 = scalar_lea.vmem [#allocation9], %s197
          %s199 = smul.u32 2, %s27
          %s201 = ssub.s32 256, 256
          %202 = vsyncadd %s195, %s201
          %s203 = smul.addr %s25, 2
          %s204 = sadd.s32 %s199, %s203
          %s205 = smul.addr %s204, 128
          %s206 = scalar_lea.hbm %s1, %s205
          %s207 = sshll.u32 %s198, 4
          %s208 = int_to_ptr.vmem [resolvable:$true] %s207
          %213 = dma.hbm_to_vmem [thread:$0]  %s206, 256, %s208, %s195, 128, 128, 8
        $region24: #{tpu_custom_call.1} parent=15 // pred_fallthru
          _
        // Predicated region
        $region25: #{tpu_custom_call.1} parent=15 // pred_check
          %p214 = pneg %p115
        $region26: #{tpu_custom_call.1} parent=15 // pred_check_branch
          %216 = sbr.rel (%p214) target = $region28
        $region27: #{tpu_custom_call.1} parent=15 // pred_region
          %s217 = sand.u32 %s18, 1
          %s218 = scalar_lea.sflag [#allocation10], %s217
          %s219 = sand.u32 %s105, 1
          %s220 = smul.addr %s219, 16
          %s221 = scalar_lea.vmem [#allocation11], %s220
          %s222 = smul.u32 2, %s27
          %s224 = ssub.s32 256, 256
          %225 = vsyncadd %s218, %s224
          %s226 = smul.addr %s25, 2
          %s227 = sadd.s32 %s222, %s226
          %s228 = smul.addr %s227, 128
          %s229 = scalar_lea.hbm %s2, %s228
          %s230 = sshll.u32 %s221, 4
          %s231 = int_to_ptr.vmem [resolvable:$true] %s230
          %236 = dma.hbm_to_vmem [thread:$0]  %s229, 256, %s231, %s218, 128, 128, 8
        $region28: #{tpu_custom_call.1} parent=15 // pred_fallthru
          _
      $region16: #{tpu_custom_call.1} parent=5 // pred_fallthru
        _
      %p237 = scmp.le.s32.totalorder 1, %s18
      %p238 = scmp.lt.s32.totalorder %s18, 5
      %p239 = pnand %p237, %p238
      %p240 = pneg %p239
      // Predicated region
      $region29: #{tpu_custom_call.1} parent=5 // pred_check
        _
      $region30: #{tpu_custom_call.1} parent=5 // pred_check_branch
        %242 = sbr.rel (%p239) target = $region32
      $region31: #{tpu_custom_call.1} parent=5 // pred_region
        %s243 = ssub.s32 %s18, 1
        %s244 = sand.u32 %s52, 1
        %s245 = scalar_lea.sflag [#allocation7], %s244
        %s246 = sand.u32 %s52, 1
        %s247 = smul.addr %s246, 16
        %s248 = scalar_lea.vmem [#allocation6], %s247
        // Predicated region
        $region33: #{tpu_custom_call.1} parent=31 // pred_check
          %p249 = pneg %p65
        $region34: #{tpu_custom_call.1} parent=31 // pred_check_branch
          %251 = sbr.rel (%p249) target = $region36
        $region35: #{tpu_custom_call.1} parent=31 // pred_region
          %252 = dma.done %s245, 256
        $region36: #{tpu_custom_call.1} parent=31 // pred_fallthru
          _
        %s253 = sand.u32 %s23, 1
        %s254 = scalar_lea.sflag [#allocation10], %s253
        %s255 = sand.u32 %s80, 1
        %s256 = smul.addr %s255, 16
        %s257 = scalar_lea.vmem [#allocation9], %s256
        // Predicated region
        $region37: #{tpu_custom_call.1} parent=31 // pred_check
          %p258 = pneg %p93
        $region38: #{tpu_custom_call.1} parent=31 // pred_check_branch
          %260 = sbr.rel (%p258) target = $region40
        $region39: #{tpu_custom_call.1} parent=31 // pred_region
          %261 = dma.done %s254, 256
        $region40: #{tpu_custom_call.1} parent=31 // pred_fallthru
          _
        %s262 = sand.u32 %s23, 1
        %s263 = scalar_lea.sflag [#allocation10], %s262
        %s264 = sand.u32 %s108, 1
        %s265 = smul.addr %s264, 16
        %s266 = scalar_lea.vmem [#allocation11], %s265
        // Predicated region
        $region41: #{tpu_custom_call.1} parent=31 // pred_check
          %p267 = pneg %p121
        $region42: #{tpu_custom_call.1} parent=31 // pred_check_branch
          %269 = sbr.rel (%p267) target = $region44
        $region43: #{tpu_custom_call.1} parent=31 // pred_region
          %270 = dma.done %s263, 256
        $region44: #{tpu_custom_call.1} parent=31 // pred_fallthru
          _
        %s271 = sand.u32 %s52, 1
        %s272 = scalar_lea.sflag [#allocation7], %s271
        %s273 = sand.u32 %s52, 1
        %s274 = smul.addr %s273, 16
        %s275 = scalar_lea.vmem [#allocation6], %s274
        %p276 = pneg %p65
        %p277 = pneg %p62
        %s278 = sand.u32 %s23, 1
        %s279 = scalar_lea.sflag [#allocation10], %s278
        %s280 = sand.u32 %s80, 1
        %s281 = smul.addr %s280, 16
        %s282 = scalar_lea.vmem [#allocation9], %s281
        %p283 = pneg %p93
        %p284 = pneg %p90
        %s285 = sand.u32 %s23, 1
        %s286 = scalar_lea.sflag [#allocation10], %s285
        %s287 = sand.u32 %s108, 1
        %s288 = smul.addr %s287, 16
        %s289 = scalar_lea.vmem [#allocation11], %s288
        %p290 = pneg %p121
        %p291 = pneg %p118
        %p292 = pneg %p149
        %p293 = pneg %p146
        %s294 = sand.u32 %s136, 1
        %s295 = scalar_lea.sflag [#allocation8], %s294
        %s296 = sand.u32 %s136, 1
        %s297 = smul.addr %s296, 16
        %s298 = scalar_lea.vmem [#allocation12], %s297
        %s299 = smul.u32 2, %s29
        %s300 = smul.u32 2, %s30
        %s301 = smul.u32 2, %s30
        %s302 = smul.u32 2, %s29
        %p303 = scmp.eq.s32.totalorder %s30, 0
        // Predicated region
        $region45: #{tpu_custom_call.1} parent=31 // pred_check
          %p304 = pneg %p303
        $region46: #{tpu_custom_call.1} parent=31 // pred_check_branch
          %306 = sbr.rel (%p304) target = $region48
        $region47: #{tpu_custom_call.1} parent=31 // pred_region
          %v307 = vld [vmem:[%s248] sm:$0xff]
          %v308 = vld [vmem:[%s248 + $0x8] sm:$0xff]
          %v309 = vmul.f32 %v307, 0.17677669
          %v310 = vmul.f32 %v308, 0.17677669
          %vm311 = vcmask 261120
          %312 = vst.msk [vmem:[#allocation2] sm:$0xff] %vm311, %v309
          %313 = vst.msk [vmem:[#allocation2 + $0x8] sm:$0xff] %vm311, %v310
          %vm314 = vcmask 7168
          %315 = vst.msk [vmem:[#allocation3] sm:$0xff] %vm314, -2.3819763e+38
          %316 = vst.msk [vmem:[#allocation3 + $0x8] sm:$0xff] %vm314, -2.3819763e+38
          %317 = vst.msk [vmem:[#allocation4] sm:$0xff] %vm314, 0.0
          %318 = vst.msk [vmem:[#allocation4 + $0x8] sm:$0xff] %vm314, 0.0
          %319 = vst.msk [vmem:[#allocation5] sm:$0xff] %vm311, 0.0
          %320 = vst.msk [vmem:[#allocation5 + $0x8] sm:$0xff] %vm311, 0.0
        $region48: #{tpu_custom_call.1} parent=31 // pred_fallthru
          _
        %v321 = vld [vmem:[#allocation2] sm:$0xff]
        %v322 = vld [vmem:[#allocation2 + $0x8] sm:$0xff]
        %v323 = vld [vmem:[%s257] sm:$0xff]
        %v324 = vld [vmem:[%s257 + $0x8] sm:$0xff]
        %vm325 = vcmask 261120
        %v327 = vsel %vm325, %v321, 0
        %v330 = vsel %vm325, %v322, 0
        %v333 = vsel %vm325, %v323, 0
        %v336 = vsel %vm325, %v324, 0
        %338 = vmatprep.subr.mxu0 0.0
        %339 = vmatpush1.xpose.msra.mxu0 0.0
        %340 = vmatprep.subr.mxu0 0.0
        %341 = vmatpush1.xpose.msra.mxu0 0.0
        %342 = vmatprep.subr.mxu0 0.0
        %343 = vmatpush1.xpose.msra.mxu0 0.0
        %344 = vmatprep.subr.mxu0 0.0
        %345 = vmatpush1.xpose.msra.mxu0 0.0
        %346 = vmatprep.subr.mxu0 0.0
        %347 = vmatpush1.xpose.msra.mxu0 0.0
        %348 = vmatprep.subr.mxu0 0.0
        %349 = vmatpush1.xpose.msra.mxu0 0.0
        %350 = vmatprep.subr.mxu0 0.0
        %351 = vmatpush1.xpose.msra.mxu0 0.0
        %352 = vmatprep.subr.mxu0 0.0
        %353 = vmatpush1.xpose.msra.mxu0 0.0
        %354 = vmatprep.subr.mxu0 0.0
        %355 = vmatpush1.xpose.msra.mxu0 0.0
        %356 = vmatprep.subr.mxu0 0.0
        %357 = vmatpush1.xpose.msra.mxu0 0.0
        %358 = vmatprep.subr.mxu0 0.0
        %359 = vmatpush1.xpose.msra.mxu0 0.0
        %360 = vmatprep.subr.mxu0 0.0
        %361 = vmatpush1.xpose.msra.mxu0 0.0
        %362 = vmatprep.subr.mxu0 0.0
        %363 = vmatpush1.xpose.msra.mxu0 0.0
        %364 = vmatprep.subr.mxu0 0.0
        %365 = vmatpush1.xpose.msra.mxu0 0.0
        %366 = vmatprep.subr.mxu0 0.0
        %367 = vmatpush1.xpose.msra.mxu0 %v336
        %368 = vmatprep.subr.mxu0 0.0
        %369 = vmatpush1.xpose.msra.mxu0 %v333
        %370 = vmatprep.subr.mxu0 0.0
        %371 = vmatpush2.xpose.msra.mxu0 0.0
        %372 = vmatprep.subr.mxu0 0.0
        %373 = vmatpush2.xpose.msra.mxu0 0.0
        %374 = vmatprep.subr.mxu0 0.0
        %375 = vmatpush2.xpose.msra.mxu0 0.0
        %376 = vmatprep.subr.mxu0 0.0
        %377 = vmatpush2.xpose.msra.mxu0 0.0
        %378 = vmatprep.subr.mxu0 0.0
        %379 = vmatpush2.xpose.msra.mxu0 0.0
        %380 = vmatprep.subr.mxu0 0.0
        %381 = vmatpush2.xpose.msra.mxu0 0.0
        %382 = vmatprep.subr.mxu0 0.0
        %383 = vmatpush2.xpose.msra.mxu0 0.0
        %384 = vmatprep.subr.mxu0 0.0
        %385 = vmatpush2.xpose.msra.mxu0 0.0
        %386 = vmatprep.subr.mxu0 0.0
        %387 = vmatpush2.xpose.msra.mxu0 0.0
        %388 = vmatprep.subr.mxu0 0.0
        %389 = vmatpush2.xpose.msra.mxu0 0.0
        %390 = vmatprep.subr.mxu0 0.0
        %391 = vmatpush2.xpose.msra.mxu0 0.0
        %392 = vmatprep.subr.mxu0 0.0
        %393 = vmatpush2.xpose.msra.mxu0 0.0
        %394 = vmatprep.subr.mxu0 0.0
        %395 = vmatpush2.xpose.msra.mxu0 0.0
        %396 = vmatprep.subr.mxu0 0.0
        %397 = vmatpush2.xpose.msra.mxu0 0.0
        %398 = vmatprep.subr.mxu0 0.0
        %399 = vmatpush2.xpose.msra.mxu0 0.0
        %400 = vmatprep.subr.mxu0 0.0
        %401 = vmatpush2.xpose.msra.mxu0 0.0
        %402 = vmatprep.mubr.f32.mxu0 0.0
        %403 = vmatmul.mubr.f32.gmra.mxu0 %v327
        %v404 = vpop.f32.mrf.mxu0
        %v405 = vadd.f32 0.0, %v404
        %v406 = vpop.f32.mrf.mxu0
        %407 = vmatprep.mubr.f32.mxu0 0.0
        %408 = vmatmul.mubr.f32.gmra.mxu0 %v330
        %v409 = vpop.f32.mrf.mxu0
        %v410 = vadd.f32 0.0, %v409
        %v411 = vpop.f32.mrf.mxu0
        %412 = vdwg.mxu0
        %v413 = vld [vmem:[%s266] sm:$0xff]
        %v414 = vld [vmem:[%s266 + $0x8] sm:$0xff]
        %v415 = vld [vmem:[#allocation3] sm:$0xff]
        %v416 = vld [vmem:[#allocation3 + $0x8] sm:$0xff]
        %vm417 = vcmask 130048
        %v418 = vsel %vm417, %v405, -inf
        %419 = vmax.xlane.f32.xlu0 %v418
        %v420 = vpop.xlane.xlu0 %419
        %v421 = vsel %vm417, %v410, -inf
        %422 = vmax.xlane.f32.xlu0 %v421
        %v423 = vpop.xlane.xlu0 %422
        %v424 = vmax.f32 %v415, %v420
        %v425 = vmax.f32 %v416, %v423
        %v426 = vsub.f32 %v415, %v424
        %v427 = vsub.f32 %v416, %v425
        %v428 = vmul.f32 %v426, 1.442695
        %v429 = vpow.pop %v428
        %v430 = vmul.f32 %v427, 1.442695
        %v431 = vpow.pop %v430
        %433 = vset.pattern.permute.xlu0 0
        %434 = vperm.xlu0 %433, %v424
        %v435 = vpop.permute.xlu0 %434
        %438 = vset.pattern.permute.xlu0 0
        %439 = vperm.xlu0 %438, %v425
        %v440 = vpop.permute.xlu0 %439
        %v442 = vsub.f32 %v405, %v435
        %v443 = vsub.f32 %v410, %v440
        %v444 = vmul.f32 %v442, 1.442695
        %v445 = vpow.pop %v444
        %v446 = vmul.f32 %v443, 1.442695
        %v447 = vpow.pop %v446
        %v448 = vld [vmem:[#allocation4] sm:$0xff]
        %v449 = vld [vmem:[#allocation4 + $0x8] sm:$0xff]
        %v450 = vmul.f32 %v429, %v448
        %v451 = vmul.f32 %v431, %v449
        %v452 = vsel %vm417, %v445, 0.0
        %453 = vadd.xlane.f32.xlu0 %v452
        %v454 = vpop.xlane.xlu0 %453
        %v455 = vsel %vm417, %v447, 0.0
        %456 = vadd.xlane.f32.xlu0 %v455
        %v457 = vpop.xlane.xlu0 %456
        %v458 = vadd.f32 %v450, %v454
        %v459 = vadd.f32 %v451, %v457
        %vm460 = vcmask 7168
        %461 = vst.msk [vmem:[#allocation4] sm:$0xff] %vm460, %v458
        %462 = vst.msk [vmem:[#allocation4 + $0x8] sm:$0xff] %vm460, %v459
        %v463 = vld [vmem:[#allocation5] sm:$0xff]
        %v464 = vld [vmem:[#allocation5 + $0x8] sm:$0xff]
        %466 = vset.pattern.permute.xlu0 0
        %467 = vperm.xlu0 %466, %v429
        %v468 = vpop.permute.xlu0 %467
        %471 = vset.pattern.permute.xlu0 0
        %472 = vperm.xlu0 %471, %v431
        %v473 = vpop.permute.xlu0 %472
        %v475 = vmul.f32 %v468, %v463
        %v476 = vmul.f32 %v473, %v464
        %v478 = vsel %vm417, %v445, 0
        %v481 = vsel %vm417, %v447, 0
        %483 = vmatprep.subr.mxu0 0.0
        %484 = vmatpush1.msra.mxu0 0.0
        %485 = vmatprep.subr.mxu0 0.0
        %486 = vmatpush1.msra.mxu0 0.0
        %487 = vmatprep.subr.mxu0 0.0
        %488 = vmatpush1.msra.mxu0 0.0
        %489 = vmatprep.subr.mxu0 0.0
        %490 = vmatpush1.msra.mxu0 0.0
        %491 = vmatprep.subr.mxu0 0.0
        %492 = vmatpush1.msra.mxu0 0.0
        %493 = vmatprep.subr.mxu0 0.0
        %494 = vmatpush1.msra.mxu0 0.0
        %495 = vmatprep.subr.mxu0 0.0
        %496 = vmatpush1.msra.mxu0 0.0
        %497 = vmatprep.subr.mxu0 0.0
        %498 = vmatpush1.msra.mxu0 0.0
        %499 = vmatprep.subr.mxu0 0.0
        %500 = vmatpush1.msra.mxu0 0.0
        %501 = vmatprep.subr.mxu0 0.0
        %502 = vmatpush1.msra.mxu0 0.0
        %503 = vmatprep.subr.mxu0 0.0
        %504 = vmatpush1.msra.mxu0 0.0
        %505 = vmatprep.subr.mxu0 0.0
        %506 = vmatpush1.msra.mxu0 0.0
        %507 = vmatprep.subr.mxu0 0.0
        %508 = vmatpush1.msra.mxu0 0.0
        %509 = vmatprep.subr.mxu0 0.0
        %510 = vmatpush1.msra.mxu0 0.0
        %511 = vmatprep.subr.mxu0 0.0
        %512 = vmatpush1.msra.mxu0 %v414
        %513 = vmatprep.subr.mxu0 0.0
        %514 = vmatpush1.msra.mxu0 %v413
        %515 = vmatprep.subr.mxu0 0.0
        %516 = vmatpush2.msra.mxu0 0.0
        %517 = vmatprep.subr.mxu0 0.0
        %518 = vmatpush2.msra.mxu0 0.0
        %519 = vmatprep.subr.mxu0 0.0
        %520 = vmatpush2.msra.mxu0 0.0
        %521 = vmatprep.subr.mxu0 0.0
        %522 = vmatpush2.msra.mxu0 0.0
        %523 = vmatprep.subr.mxu0 0.0
        %524 = vmatpush2.msra.mxu0 0.0
        %525 = vmatprep.subr.mxu0 0.0
        %526 = vmatpush2.msra.mxu0 0.0
        %527 = vmatprep.subr.mxu0 0.0
        %528 = vmatpush2.msra.mxu0 0.0
        %529 = vmatprep.subr.mxu0 0.0
        %530 = vmatpush2.msra.mxu0 0.0
        %531 = vmatprep.subr.mxu0 0.0
        %532 = vmatpush2.msra.mxu0 0.0
        %533 = vmatprep.subr.mxu0 0.0
        %534 = vmatpush2.msra.mxu0 0.0
        %535 = vmatprep.subr.mxu0 0.0
        %536 = vmatpush2.msra.mxu0 0.0
        %537 = vmatprep.subr.mxu0 0.0
        %538 = vmatpush2.msra.mxu0 0.0
        %539 = vmatprep.subr.mxu0 0.0
        %540 = vmatpush2.msra.mxu0 0.0
        %541 = vmatprep.subr.mxu0 0.0
        %542 = vmatpush2.msra.mxu0 0.0
        %543 = vmatprep.subr.mxu0 0.0
        %544 = vmatpush2.msra.mxu0 0.0
        %545 = vmatprep.subr.mxu0 0.0
        %546 = vmatpush2.msra.mxu0 0.0
        %547 = vmatprep.mubr.f32.mxu0 0.0
        %548 = vmatmul.mubr.f32.gmra.mxu0 %v478
        %v549 = vpop.f32.mrf.mxu0
        %v550 = vadd.f32 0.0, %v549
        %v551 = vpop.f32.mrf.mxu0
        %552 = vmatprep.mubr.f32.mxu0 0.0
        %553 = vmatmul.mubr.f32.gmra.mxu0 %v481
        %v554 = vpop.f32.mrf.mxu0
        %v555 = vadd.f32 0.0, %v554
        %v556 = vpop.f32.mrf.mxu0
        %557 = vdwg.mxu0
        %v558 = vadd.f32 %v475, %v550
        %v559 = vadd.f32 %v476, %v555
        %560 = vst.msk [vmem:[#allocation5] sm:$0xff] %vm325, %v558
        %561 = vst.msk [vmem:[#allocation5 + $0x8] sm:$0xff] %vm325, %v559
        %562 = vst.msk [vmem:[#allocation3] sm:$0xff] %vm460, %v424
        %563 = vst.msk [vmem:[#allocation3 + $0x8] sm:$0xff] %vm460, %v425
        // Predicated region
        $region49: #{tpu_custom_call.1} parent=31 // pred_check
          %p564 = pneg %p303
        $region50: #{tpu_custom_call.1} parent=31 // pred_check_branch
          %566 = sbr.rel (%p564) target = $region52
        $region51: #{tpu_custom_call.1} parent=31 // pred_region
          %v567 = vld [vmem:[#allocation4] sm:$0xff]
          %v568 = vld [vmem:[#allocation4 + $0x8] sm:$0xff]
          %v569 = vrcp.pop %v567
          %v570 = vrcp.pop %v568
          %v571 = vld [vmem:[#allocation5] sm:$0xff]
          %v572 = vld [vmem:[#allocation5 + $0x8] sm:$0xff]
          %574 = vset.pattern.permute.xlu0 0
          %575 = vperm.xlu0 %574, %v569
          %v576 = vpop.permute.xlu0 %575
          %579 = vset.pattern.permute.xlu0 0
          %580 = vperm.xlu0 %579, %v570
          %v581 = vpop.permute.xlu0 %580
          %v583 = vmul.f32 %v571, %v576
          %v584 = vmul.f32 %v572, %v581
          %585 = vst.msk [vmem:[%s298] sm:$0xff] %vm325, %v583
          %586 = vst.msk [vmem:[%s298 + $0x8] sm:$0xff] %vm325, %v584
        $region52: #{tpu_custom_call.1} parent=31 // pred_fallthru
          _
        %s587 = sand.u32 %s136, 1
        %s588 = scalar_lea.sflag [#allocation8], %s587
        %s589 = sand.u32 %s136, 1
        %s590 = smul.addr %s589, 16
        %s591 = scalar_lea.vmem [#allocation12], %s590
        // Predicated region
        $region53: #{tpu_custom_call.1} parent=31 // pred_check
          %p592 = pneg %p146
        $region54: #{tpu_custom_call.1} parent=31 // pred_check_branch
          %594 = sbr.rel (%p592) target = $region56
        $region55: #{tpu_custom_call.1} parent=31 // pred_region
          %s595 = smul.u32 2, %s29
          %s597 = ssub.s32 256, 256
          %598 = vsyncadd %s588, %s597
          %s599 = smul.addr %s28, 2
          %s600 = sadd.s32 %s595, %s599
          %s601 = smul.addr %s600, 128
          %s602 = scalar_lea.hbm %s3, %s601
          %s603 = sshll.u32 %s591, 4
          %s604 = int_to_ptr.vmem [resolvable:$true] %s603
          %609 = dma.vmem_to_hbm [thread:$0]  %s604, 256, %s602, %s588, 128, 128, 8
        $region56: #{tpu_custom_call.1} parent=31 // pred_fallthru
          _
      $region32: #{tpu_custom_call.1} parent=5 // pred_fallthru
        _
      %p610 = scmp.le.s32.totalorder 2, %s18
      // Predicated region
      $region57: #{tpu_custom_call.1} parent=5 // pred_check
        %p611 = pneg %p610
      $region58: #{tpu_custom_call.1} parent=5 // pred_check_branch
        %613 = sbr.rel (%p611) target = $region60
      $region59: #{tpu_custom_call.1} parent=5 // pred_region
        %s614 = ssub.s32 %s18, 2
        // Predicated region
        $region61: #{tpu_custom_call.1} parent=59 // pred_check
          %p615 = pneg %p152
        $region62: #{tpu_custom_call.1} parent=59 // pred_check_branch
          %617 = sbr.rel (%p615) target = $region64
        $region63: #{tpu_custom_call.1} parent=59 // pred_region
          %s618 = sand.u32 %s137, 1
          %s619 = scalar_lea.sflag [#allocation8], %s618
          %s620 = sand.u32 %s137, 1
          %s621 = smul.addr %s620, 16
          %s622 = scalar_lea.vmem [#allocation12], %s621
          %623 = dma.done %s619, 256
        $region64: #{tpu_custom_call.1} parent=59 // pred_fallthru
          _
      $region60: #{tpu_custom_call.1} parent=5 // pred_fallthru
        _
    $region6: #{tpu_custom_call.1} parent=1 // loop_footer
      %s22 = sadd.s32 1, %s18
    $region7: #{tpu_custom_call.1} parent=1 // loop_footer_branch
      %17 = sbr.rel target = $region3
    $region8: #{tpu_custom_call.1} parent=1 // loop_exit
      _
    %624 = vsyncpa [#allocation7], 1
    %s625 = scalar_lea.sflag [#allocation7], 1
    %626 = vsyncpa %s625, 1
    %627 = vsyncpa [#allocation10], 1
    %s628 = scalar_lea.sflag [#allocation10], 1
    %629 = vsyncpa %s628, 1
    %630 = vsyncpa [#allocation8], 1
    %s631 = scalar_lea.sflag [#allocation8], 1
    %632 = vsyncpa %s631, 1

</llo_original>
